<compile_context>
chip_gen: v5e
topology: v5e:2x2
jax: 0.10.0
libtpu: 0.0.40
codegen_flags: <defaults>
</compile_context>

<pallas_src>
import functools

import jax
import jax.numpy as jnp
from jax import lax
from jax.experimental import pallas as pl
from jax.experimental.pallas import tpu as pltpu

FRAME_NUM = 10
TOKENS_PER_FRAME = 65

# Gate for the "whole token table resident in VMEM" strategy (v7x has 64 MiB
# physical VMEM, 32 MiB scoped default -> leave plenty of headroom).
_VMEM_TABLE_BUDGET_BYTES = 40 * 1024 * 1024


def _round_up(x, m):
    return (x + m - 1) // m * m


def _embed_kernel(ids_ref, tok_table_ref, pos_emb_ref, out_ref, *, vocab):
    # ids_ref       : (1, TS, 1) int32   -- token ids for this tile
    # tok_table_ref : (V, Hp)    f32     -- whole token table, VMEM-resident
    # pos_emb_ref   : (TS, Hp)   f32     -- precomputed pos+frame embeddings
    # out_ref       : (1, TS, Hp)
    ids = ids_ref[0]                                          # (TS, 1)
    ts = ids.shape[0]

    # One-hot gather on the MXU: (TS, V) @ (V, Hp) -> (TS, Hp).
    col = lax.broadcasted_iota(jnp.int32, (ts, vocab), dimension=1)
    one_hot = (ids == col).astype(tok_table_ref.dtype)        # (TS, V)
    tok_emb = jnp.dot(one_hot, tok_table_ref[...],
                      preferred_element_type=jnp.float32)     # (TS, Hp)

    out = tok_emb + pos_emb_ref[...].astype(jnp.float32)
    out_ref[...] = out[None].astype(out_ref.dtype)


def video_token_embeddings(tokens, token_table, pos_table, frame_table):
    """Pallas implementation of Video_Token_Embeddings.forward."""
    B, S = tokens.shape
    V, H = token_table.shape
    assert S <= FRAME_NUM * TOKENS_PER_FRAME

    # Lane-dense hidden dim.
    Hp = _round_up(H, 128)
    if Hp != H:
        pad_h = ((0, 0), (0, Hp - H))
        token_table = jnp.pad(token_table, pad_h)
        pos_table = jnp.pad(pos_table, pad_h)
        frame_table = jnp.pad(frame_table, pad_h)

    # Token tile: 128 tokens per grid step (or S rounded up to a sublane
    # multiple when the sequence is short).
    TS = 128 if S >= 128 else _round_up(S, 8)
    S_pad = _round_up(S, TS)

    # Precompute the tiny positional + frame embedding slab once in the
    # wrapper; padding rows (>= S) are discarded after the kernel.
    idx = jnp.arange(S_pad)
    pos_ids = idx % TOKENS_PER_FRAME
    frm_ids = jnp.minimum(idx // TOKENS_PER_FRAME, FRAME_NUM - 1)
    pos_emb = pos_table[pos_ids] + frame_table[frm_ids]        # (S_pad, Hp)

    # Pad token ids with 0 (a valid id); padded rows are sliced away below.
    tokens = tokens.astype(jnp.int32)
    if S_pad != S:
        tokens = jnp.pad(tokens, ((0, 0), (0, S_pad - S)))
    # Trailing singleton dim keeps the ids 2-D ((TS, 1)) inside the kernel so
    # the one-hot compare needs no lane<->sublane relayout.
    tokens3 = tokens[..., None]                                # (B, S_pad, 1)

    # Whole token table stays VMEM-resident (constant index_map => one DMA).
    # TODO(synk): for large codebooks exceeding the VMEM budget, fall back to a
    # batched manual row-gather (make_async_copy into a double-buffered scratch).
    table_bytes = V * Hp * token_table.dtype.itemsize
    assert table_bytes <= _VMEM_TABLE_BUDGET_BYTES, (
        "token table too large for the VMEM-resident gather strategy")

    grid = (B, S_pad // TS)
    kernel = functools.partial(_embed_kernel, vocab=V)

    out = pl.pallas_call(
        kernel,
        out_shape=jax.ShapeDtypeStruct((B, S_pad, Hp), token_table.dtype),
        grid_spec=pltpu.PrefetchScalarGridSpec(
            num_scalar_prefetch=0,
            grid=grid,
            in_specs=[
                pl.BlockSpec((1, TS, 1), lambda b, t: (b, t, 0)),   # token ids
                pl.BlockSpec((V, Hp), lambda b, t: (0, 0)),         # resident table
                pl.BlockSpec((TS, Hp), lambda b, t: (t, 0)),        # pos+frame slab
            ],
            out_specs=pl.BlockSpec((1, TS, Hp), lambda b, t: (b, t, 0)),
        ),
        compiler_params=pltpu.CompilerParams(
            dimension_semantics=("parallel", "parallel")),
    )(tokens3, token_table, pos_emb)

    return out[:, :S, :H]


def reference(tokens, token_table, pos_table, frame_table):
    """Pure-JAX reference matching the PyTorch forward exactly."""
    B, S = tokens.shape
    emb = token_table[tokens]                                    # (B, S, H)
    pos_ids = jnp.tile(jnp.arange(TOKENS_PER_FRAME), FRAME_NUM)   # (650,)
    frm_ids = jnp.repeat(jnp.arange(FRAME_NUM), TOKENS_PER_FRAME)
    pos_emb = pos_table[pos_ids] + frame_table[frm_ids]           # (650, H)
    return emb + pos_emb[None, :S]


if __name__ == "__main__":
    key = jax.random.PRNGKey(0)
    k_tok, k_pos, k_frm, k_ids = jax.random.split(key, 4)

    # Small synthetic config.
    video_codebook_size = 64          # -> vocab = 65
    hidden_size = 128
    B, S = 2, 70                      # S crosses a frame boundary (65)

    vocab = video_codebook_size + 1
    token_table = jax.random.normal(k_tok, (vocab, hidden_size), jnp.float32)
    pos_table = jax.random.normal(k_pos, (TOKENS_PER_FRAME, hidden_size), jnp.float32)
    frame_table = jax.random.normal(k_frm, (FRAME_NUM, hidden_size), jnp.float32)
    tokens = jax.random.randint(k_ids, (B, S), 0, vocab, jnp.int32)

    out = video_token_embeddings(tokens, token_table, pos_table, frame_table)
    out = jax.block_until_ready(out)

    ref = reference(tokens, token_table, pos_table, frame_table)
    assert out.shape == (B, S, hidden_size)
    assert jnp.allclose(out, ref, atol=1e-5, rtol=1e-5)
    print("KERNEL_OK")
</pallas_src>

<mosaic_0001>
module attributes {stable_mosaic.version = 11 : i64} {
  func.func @_embed_kernel(%arg0: i32, %arg1: i32, %arg2: memref<1x72x1xi32, #tpu.memory_space<vmem>>, %arg3: memref<65x128xf32, #tpu.memory_space<vmem>>, %arg4: memref<72x128xf32, #tpu.memory_space<vmem>>, %arg5: memref<1x72x128xf32, #tpu.memory_space<vmem>>) attributes {dimension_semantics = [#tpu.dimension_semantics<parallel>, #tpu.dimension_semantics<parallel>], iteration_bounds = array<i64: 2, 1>, scalar_prefetch = 0 : i64, scratch_operands = 0 : i64, tpu.core_type = #tpu.core_type<tc>, window_params = [{transform_indices = @transform_0, window_bounds = array<i64: 1, 72, 1>}, {pipeline_mode = #tpu.pipeline_mode<synchronous>, transform_indices = @transform_1, window_bounds = array<i64: 65, 128>}, {transform_indices = @transform_2, window_bounds = array<i64: 72, 128>}, {transform_indices = @transform_3, window_bounds = array<i64: 1, 72, 128>}]} {
    %c0 = arith.constant 0 : index
    %c0_0 = arith.constant 0 : index
    %c0_1 = arith.constant 0 : index
    %0 = vector.load %arg2[%c0, %c0_0, %c0_1] : memref<1x72x1xi32, #tpu.memory_space<vmem>>, vector<1x72x1xi32>
    %1 = vector.shape_cast %0 : vector<1x72x1xi32> to vector<72x1xi32>
    %2 = tpu.iota {dimensions = array<i32: 1>} : vector<72x65xi32>
    %3 = vector.broadcast %1 : vector<72x1xi32> to vector<72x65xi32>
    %4 = arith.cmpi eq, %3, %2 : vector<72x65xi32>
    %5 = arith.extui %4 : vector<72x65xi1> to vector<72x65xi32>
    %6 = arith.sitofp %5 : vector<72x65xi32> to vector<72x65xf32>
    %c0_2 = arith.constant 0 : index
    %c0_3 = arith.constant 0 : index
    %7 = vector.load %arg3[%c0_2, %c0_3] : memref<65x128xf32, #tpu.memory_space<vmem>>, vector<65x128xf32>
    %cst = arith.constant dense<0.000000e+00> : vector<72x128xf32>
    %8 = tpu.matmul %6, %7, %cst {dimension_numbers = #tpu.dot_dimension_numbers<[1], [0], [0], [1], [0, 0, 1, 1], [], []>} : vector<72x65xf32>, vector<65x128xf32>, vector<72x128xf32> -> vector<72x128xf32>
    %c0_4 = arith.constant 0 : index
    %c0_5 = arith.constant 0 : index
    %9 = vector.load %arg4[%c0_4, %c0_5] : memref<72x128xf32, #tpu.memory_space<vmem>>, vector<72x128xf32>
    %10 = arith.addf %8, %9 : vector<72x128xf32>
    %11 = vector.shape_cast %10 : vector<72x128xf32> to vector<1x72x128xf32>
    %c0_6 = arith.constant 0 : index
    %c0_7 = arith.constant 0 : index
    %c0_8 = arith.constant 0 : index
    %12 = vector.load %arg5[%c0_6, %c0_7, %c0_8] : memref<1x72x128xf32, #tpu.memory_space<vmem>>, vector<1x72x128xf32>
    tpu.vector_store %arg5[%c0_6, %c0_7, %c0_8], %11 {strides = array<i32>} : memref<1x72x128xf32, #tpu.memory_space<vmem>>, vector<1x72x128xf32>,
    return
  }
  func.func @transform_0(%arg0: i32, %arg1: i32) -> (i32, i32, i32) {
    %c0_i32 = arith.constant 0 : i32
    %c0_i32_0 = arith.constant 0 : i32
    return %arg0, %arg1, %c0_i32 : i32, i32, i32
  }
  func.func @transform_1(%arg0: i32, %arg1: i32) -> (i32, i32) {
    %c0_i32 = arith.constant 0 : i32
    %c0_i32_0 = arith.constant 0 : i32
    %c0_i32_1 = arith.constant 0 : i32
    return %c0_i32, %c0_i32_0 : i32, i32
  }
  func.func @transform_2(%arg0: i32, %arg1: i32) -> (i32, i32) {
    %c0_i32 = arith.constant 0 : i32
    %c0_i32_0 = arith.constant 0 : i32
    return %arg1, %c0_i32 : i32, i32
  }
  func.func @transform_3(%arg0: i32, %arg1: i32) -> (i32, i32, i32) {
    %c0_i32 = arith.constant 0 : i32
    %c0_i32_0 = arith.constant 0 : i32
    return %arg0, %arg1, %c0_i32 : i32, i32, i32
  }
}

</mosaic_0001>

<llo_original>
// kernel: tpu_custom_call.1
$region0: #{tpu_custom_call.1}
  #allocation0 [shape = 'u32[]', space=smem, size = 0x4, offset = 0x4, fixed_abs, tag = 'smem constant byte address 0x4 - core index']
  #allocation1 [shape = 'u32[72,128]{1,0:T(1,128)}', space=vmem, size = 0x9000, scoped, tag = 'internal scratch']
  %s0 = inlined_call_operand.vmem [shape: s32[2,72,1], index: 0, kind: input, shape index: {}]
  %s1 = inlined_call_operand.vmem [shape: f32[65,128], index: 1, kind: input, shape index: {}]
  %s2 = inlined_call_operand.vmem [shape: f32[72,128], index: 2, kind: input, shape index: {}]
  %s3 = inlined_call_operand.hbm [shape: f32[2,72,128], index: 3, kind: output, shape index: {}]
  %s4 = sld [smem:[#allocation0]]
  $region45: #{tpu_custom_call.1} parent=0
    _
  %s6 = ssub.s32 1, %s4
  %s7 = scalar_select 0, %s6, %s4
  $region1: #{tpu_custom_call.1} parent=0
    #allocation2 [shape = 'u8[73728]{0}', space=vmem, size = 0x12000, scoped, tag = 'output window, operand 0']
    #allocation3 [shape = 's32[2]{0}', space=sflag, size = 0x8, scoped, tag = 'scoped memory for tpu_custom_call.1']
    %8 = vsyncpa [#allocation3], 0
    %s9 = scalar_lea.sflag [#allocation3], 1
    %10 = vsyncpa %s9, 0
    loop: start=0, step=1, limit=4
    $region2: #{tpu_custom_call.1} parent=1 // loop_pre_header
      _
    $region3: #{tpu_custom_call.1} parent=1 // loop_header
      %s12 = sphi 0, %s16
      %p13 = scmp.ge.s32.totalorder %s12, 4
      %s19 = sphi 0, %s31
      %s20 = sphi 0, %s27
      %s21 = sphi 0, %s19
      %s22 = sphi 0, %s20
      %s23 = sphi 0, %s21
      %s24 = sphi 0, %s22
      %s36 = sphi 0, %s38
      %s39 = sphi 0, %s36
      %s40 = sphi 0, %s39
      %s56 = sphi 0, %s40
      %s60 = sphi 0, %s60
      %s62 = sphi 0, %s60
      %s63 = sphi 0, %s62
      %s77 = sphi 0, %s63
      %s83 = sphi 0, %s85
      %s86 = sphi 0, %s83
      %s87 = sphi 0, %s86
      %s103 = sphi 0, %s87
      %s111 = sphi 0, %s113
      %s114 = sphi 0, %s111
      %s115 = sphi 0, %s114
      %s131 = sphi 0, %s115
    $region4: #{tpu_custom_call.1} parent=1 // loop_header_branch
      %15 = sbr.rel (%p13) target = $region8
    $region5: #{tpu_custom_call.1} parent=1 // loop_body
      %s17 = ssub.s32 %s12, 1
      %s18 = ssub.s32 %s12, 2
      %s25 = sadd.s32 1, %s20
      %p26 = scmp.ge.s32.totalorder %s25, 1
      %s27 = scalar_select %p26, 0, %s25
      %s28 = sadd.s32 1, %s19
      %s29 = scalar_select %p26, %s28, %s19
      %p30 = scmp.ge.s32.totalorder %s29, 2
      %s31 = scalar_select %p30, 0, %s29
      %s32 = ssub.s32 %s19, %s31
      %s33 = ssub.s32 %s20, %s27
      %s34 = sor.u32 %s32, %s33
      %p35 = scmp.eq.s32.totalorder %s34, 0
      %s37 = sadd.s32 %s36, 1
      %s38 = scalar_select %p35, %s36, %s37
      %p41 = pneg %p35
      %p42 = scmp.eq.s32.totalorder %s12, 1
      %p43 = por %p41, %p42
      %p44 = scmp.ne.s32.totalorder %s36, %s39
      %p45 = scmp.eq.s32.totalorder %s12, 0
      %p46 = por %p44, %p45
      %p47 = scmp.ne.s32.totalorder %s36, %s39
      %p48 = scmp.eq.s32.totalorder %s17, 1
      %p49 = por %p47, %p48
      %p50 = scmp.ne.s32.totalorder %s39, %s40
      %p51 = scmp.eq.s32.totalorder %s17, 0
      %p52 = por %p50, %p51
      %p53 = scmp.ne.s32.totalorder %s39, %s40
      %p54 = scmp.eq.s32.totalorder %s18, 1
      %p55 = por %p53, %p54
      %p57 = scmp.ne.s32.totalorder %s40, %s56
      %p58 = scmp.eq.s32.totalorder %s18, 0
      %p59 = por %p57, %p58
      %s61 = sadd.s32 %s60, 1
      %p64 = scmp.eq.s32.totalorder %s12, 1
      %p65 = scmp.ne.s32.totalorder %s60, %s62
      %p66 = scmp.eq.s32.totalorder %s12, 0
      %p67 = por %p65, %p66
      %p68 = scmp.ne.s32.totalorder %s60, %s62
      %p69 = scmp.eq.s32.totalorder %s17, 1
      %p70 = por %p68, %p69
      %p71 = scmp.ne.s32.totalorder %s62, %s63
      %p72 = scmp.eq.s32.totalorder %s17, 0
      %p73 = por %p71, %p72
      %p74 = scmp.ne.s32.totalorder %s62, %s63
      %p75 = scmp.eq.s32.totalorder %s18, 1
      %p76 = por %p74, %p75
      %p78 = scmp.ne.s32.totalorder %s63, %s77
      %p79 = scmp.eq.s32.totalorder %s18, 0
      %p80 = por %p78, %p79
      %s81 = ssub.s32 %s20, %s27
      %p82 = scmp.eq.s32.totalorder %s81, 0
      %s84 = sadd.s32 %s83, 1
      %s85 = scalar_select %p82, %s83, %s84
      %p88 = pneg %p82
      %p89 = scmp.eq.s32.totalorder %s12, 1
      %p90 = por %p88, %p89
      %p91 = scmp.ne.s32.totalorder %s83, %s86
      %p92 = scmp.eq.s32.totalorder %s12, 0
      %p93 = por %p91, %p92
      %p94 = scmp.ne.s32.totalorder %s83, %s86
      %p95 = scmp.eq.s32.totalorder %s17, 1
      %p96 = por %p94, %p95
      %p97 = scmp.ne.s32.totalorder %s86, %s87
      %p98 = scmp.eq.s32.totalorder %s17, 0
      %p99 = por %p97, %p98
      %p100 = scmp.ne.s32.totalorder %s86, %s87
      %p101 = scmp.eq.s32.totalorder %s18, 1
      %p102 = por %p100, %p101
      %p104 = scmp.ne.s32.totalorder %s87, %s103
      %p105 = scmp.eq.s32.totalorder %s18, 0
      %p106 = por %p104, %p105
      %s107 = ssub.s32 %s19, %s31
      %s108 = ssub.s32 %s20, %s27
      %s109 = sor.u32 %s107, %s108
      %p110 = scmp.eq.s32.totalorder %s109, 0
      %s112 = sadd.s32 %s111, 1
      %s113 = scalar_select %p110, %s111, %s112
      %p116 = pneg %p110
      %p117 = scmp.eq.s32.totalorder %s12, 1
      %p118 = por %p116, %p117
      %p119 = scmp.ne.s32.totalorder %s111, %s114
      %p120 = scmp.eq.s32.totalorder %s12, 0
      %p121 = por %p119, %p120
      %p122 = scmp.ne.s32.totalorder %s111, %s114
      %p123 = scmp.eq.s32.totalorder %s17, 1
      %p124 = por %p122, %p123
      %p125 = scmp.ne.s32.totalorder %s114, %s115
      %p126 = scmp.eq.s32.totalorder %s17, 0
      %p127 = por %p125, %p126
      %p128 = scmp.ne.s32.totalorder %s114, %s115
      %p129 = scmp.eq.s32.totalorder %s18, 1
      %p130 = por %p128, %p129
      %p132 = scmp.ne.s32.totalorder %s115, %s131
      %p133 = scmp.eq.s32.totalorder %s18, 0
      %p134 = por %p132, %p133
      %p135 = scmp.le.s32.totalorder 1, %s12
      %p136 = scmp.lt.s32.totalorder %s12, 3
      %p137 = pnand %p135, %p136
      %p138 = pneg %p137
      // Predicated region
      $region9: #{tpu_custom_call.1} parent=5 // pred_check
        _
      $region10: #{tpu_custom_call.1} parent=5 // pred_check_branch
        %140 = sbr.rel (%p137) target = $region12
      $region11: #{tpu_custom_call.1} parent=5 // pred_region
        %s141 = ssub.s32 %s12, 1
        // Predicated region
        $region13: #{tpu_custom_call.1} parent=11 // pred_check
          %p142 = pneg %p73
        $region14: #{tpu_custom_call.1} parent=11 // pred_check_branch
          %144 = sbr.rel (%p142) target = $region16
        $region15: #{tpu_custom_call.1} parent=11 // pred_region
          _
        $region16: #{tpu_custom_call.1} parent=11 // pred_fallthru
          _
        // Predicated region
        $region17: #{tpu_custom_call.1} parent=11 // pred_check
          %p145 = pneg %p99
        $region18: #{tpu_custom_call.1} parent=11 // pred_check_branch
          %147 = sbr.rel (%p145) target = $region20
        $region19: #{tpu_custom_call.1} parent=11 // pred_region
          %s148 = smul.u32 9, %s22
          %p149 = scmp.lt.s32.totalorder %s148, 8
          %s150 = scalar_select %p149, %s148, 8
          %s151 = smul.addr %s150, 8
          %s152 = scalar_lea.vmem %s2, %s151
          %s153 = smul.u32 9, %s22
        $region20: #{tpu_custom_call.1} parent=11 // pred_fallthru
          _
      $region12: #{tpu_custom_call.1} parent=5 // pred_fallthru
        _
      %p154 = scmp.lt.s32.totalorder %s12, 2
      // Predicated region
      $region21: #{tpu_custom_call.1} parent=5 // pred_check
        %p155 = pneg %p154
      $region22: #{tpu_custom_call.1} parent=5 // pred_check_branch
        %157 = sbr.rel (%p155) target = $region24
      $region23: #{tpu_custom_call.1} parent=5 // pred_region
        // Predicated region
        $region25: #{tpu_custom_call.1} parent=23 // pred_check
          %p158 = pneg %p46
        $region26: #{tpu_custom_call.1} parent=23 // pred_check_branch
          %160 = sbr.rel (%p158) target = $region28
        $region27: #{tpu_custom_call.1} parent=23 // pred_region
          %s161 = smul.u32 9, %s20
          %p162 = scmp.lt.s32.totalorder %s19, 1
          %s163 = scalar_select %p162, %s19, 1
          %p164 = scmp.lt.s32.totalorder %s161, 8
          %s165 = scalar_select %p164, %s161, 8
          %s166 = smul.addr %s163, 9
          %s167 = sadd.s32 %s165, %s166
          %s168 = smul.addr %s167, 8
          %s169 = scalar_lea.vmem %s0, %s168
          %s170 = smul.u32 9, %s20
        $region28: #{tpu_custom_call.1} parent=23 // pred_fallthru
          _
      $region24: #{tpu_custom_call.1} parent=5 // pred_fallthru
        _
      %p171 = scmp.le.s32.totalorder 1, %s12
      %p172 = scmp.lt.s32.totalorder %s12, 3
      %p173 = pnand %p171, %p172
      %p174 = pneg %p173
      // Predicated region
      $region29: #{tpu_custom_call.1} parent=5 // pred_check
        _
      $region30: #{tpu_custom_call.1} parent=5 // pred_check_branch
        %176 = sbr.rel (%p173) target = $region32
      $region31: #{tpu_custom_call.1} parent=5 // pred_region
        %s177 = ssub.s32 %s12, 1
        %s178 = smul.u32 9, %s22
        %p179 = scmp.lt.s32.totalorder %s21, 1
        %s180 = scalar_select %p179, %s21, 1
        %p181 = scmp.lt.s32.totalorder %s178, 8
        %s182 = scalar_select %p181, %s178, 8
        %s183 = smul.addr %s180, 9
        %s184 = sadd.s32 %s182, %s183
        %s185 = smul.addr %s184, 8
        %s186 = scalar_lea.vmem %s0, %s185
        %p187 = pneg %p52
        %p188 = pneg %p49
        %p189 = pneg %p73
        %p190 = pneg %p70
        %s191 = smul.u32 9, %s22
        %p192 = scmp.lt.s32.totalorder %s191, 8
        %s193 = scalar_select %p192, %s191, 8
        %s194 = smul.addr %s193, 8
        %s195 = scalar_lea.vmem %s2, %s194
        %p196 = pneg %p99
        %p197 = pneg %p96
        %p198 = pneg %p127
        %p199 = pneg %p124
        %s200 = sand.u32 %s114, 1
        %s201 = scalar_lea.sflag [#allocation3], %s200
        %s202 = sand.u32 %s114, 1
        %s203 = smul.addr %s202, 72
        %s204 = scalar_lea.vmem [#allocation2], %s203
        %s205 = smul.u32 9, %s22
        %p206 = scmp.lt.s32.totalorder %s21, 1
        %s207 = scalar_select %p206, %s21, 1
        %p208 = scmp.lt.s32.totalorder %s205, 8
        %s209 = scalar_select %p208, %s205, 8
        %s210 = smul.addr %s207, 9
        %s211 = sadd.s32 %s209, %s210
        %s212 = smul.addr %s211, 8
        %s213 = scalar_lea.vmem %s0, %s212
        %s214 = smul.u32 9, %s22
        %s215 = smul.u32 9, %s22
        %p216 = scmp.lt.s32.totalorder %s215, 8
        %s217 = scalar_select %p216, %s215, 8
        %s218 = smul.addr %s217, 8
        %s219 = scalar_lea.vmem %s2, %s218
        %s220 = smul.u32 9, %s22
        %s221 = smul.u32 9, %s22
        %v222 = vld [vmem:[%s213] sm:$0xff]
        %v223 = vld [vmem:[%s213 + $0x8] sm:$0xff]
        %v224 = vld [vmem:[%s213 + $0x10] sm:$0xff]
        %v225 = vld [vmem:[%s213 + $0x18] sm:$0xff]
        %v226 = vld [vmem:[%s213 + $0x20] sm:$0xff]
        %v227 = vld [vmem:[%s213 + $0x28] sm:$0xff]
        %v228 = vld [vmem:[%s213 + $0x30] sm:$0xff]
        %v229 = vld [vmem:[%s213 + $0x38] sm:$0xff]
        %v230 = vld [vmem:[%s213 + $0x40] sm:$0xff]
        %v231 = vlaneseq
        %v232 = vand.u32 %v231, 127
        %233 = vset.pattern.permute.xlu0 0
        %234 = vperm.xlu0 %233, %v222
        %v235 = vpop.permute.xlu0 %234
        %236 = vset.pattern.permute.xlu0 0
        %237 = vperm.xlu0 %236, %v223
        %v238 = vpop.permute.xlu0 %237
        %239 = vset.pattern.permute.xlu0 0
        %240 = vperm.xlu0 %239, %v224
        %v241 = vpop.permute.xlu0 %240
        %242 = vset.pattern.permute.xlu0 0
        %243 = vperm.xlu0 %242, %v225
        %v244 = vpop.permute.xlu0 %243
        %245 = vset.pattern.permute.xlu0 0
        %246 = vperm.xlu0 %245, %v226
        %v247 = vpop.permute.xlu0 %246
        %248 = vset.pattern.permute.xlu0 0
        %249 = vperm.xlu0 %248, %v227
        %v250 = vpop.permute.xlu0 %249
        %251 = vset.pattern.permute.xlu0 0
        %252 = vperm.xlu0 %251, %v228
        %v253 = vpop.permute.xlu0 %252
        %254 = vset.pattern.permute.xlu0 0
        %255 = vperm.xlu0 %254, %v229
        %v256 = vpop.permute.xlu0 %255
        %257 = vset.pattern.permute.xlu0 0
        %258 = vperm.xlu0 %257, %v230
        %v259 = vpop.permute.xlu0 %258
        %vm260 = vcmp.eq.s32.totalorder %v235, %v232
        %vm261 = vcmp.eq.s32.totalorder %v238, %v232
        %vm262 = vcmp.eq.s32.totalorder %v241, %v232
        %vm263 = vcmp.eq.s32.totalorder %v244, %v232
        %vm264 = vcmp.eq.s32.totalorder %v247, %v232
        %vm265 = vcmp.eq.s32.totalorder %v250, %v232
        %vm266 = vcmp.eq.s32.totalorder %v253, %v232
        %vm267 = vcmp.eq.s32.totalorder %v256, %v232
        %vm268 = vcmp.eq.s32.totalorder %v259, %v232
        %v269 = vsel %vm260, 1, 0
        %v270 = vsel %vm261, 1, 0
        %v271 = vsel %vm262, 1, 0
        %v272 = vsel %vm263, 1, 0
        %v273 = vsel %vm264, 1, 0
        %v274 = vsel %vm265, 1, 0
        %v275 = vsel %vm266, 1, 0
        %v276 = vsel %vm267, 1, 0
        %v277 = vsel %vm268, 1, 0
        %v278 = vcvt.s32.f32 %v269
        %v279 = vcvt.s32.f32 %v270
        %v280 = vcvt.s32.f32 %v271
        %v281 = vcvt.s32.f32 %v272
        %v282 = vcvt.s32.f32 %v273
        %v283 = vcvt.s32.f32 %v274
        %v284 = vcvt.s32.f32 %v275
        %v285 = vcvt.s32.f32 %v276
        %v286 = vcvt.s32.f32 %v277
        %v287 = vld [vmem:[%s1] sm:$0xff]
        %v288 = vld [vmem:[%s1 + $0x8] sm:$0xff]
        %v289 = vld [vmem:[%s1 + $0x10] sm:$0xff]
        %v290 = vld [vmem:[%s1 + $0x18] sm:$0xff]
        %v291 = vld [vmem:[%s1 + $0x20] sm:$0xff]
        %v292 = vld [vmem:[%s1 + $0x28] sm:$0xff]
        %v293 = vld [vmem:[%s1 + $0x30] sm:$0xff]
        %v294 = vld [vmem:[%s1 + $0x38] sm:$0xff]
        %v295 = vld [vmem:[%s1 + $0x40] sm:$0x1]
        %v296 = vld [vmem:[%s219] sm:$0xff]
        %v297 = vld [vmem:[%s219 + $0x8] sm:$0xff]
        %v298 = vld [vmem:[%s219 + $0x10] sm:$0xff]
        %v299 = vld [vmem:[%s219 + $0x18] sm:$0xff]
        %v300 = vld [vmem:[%s219 + $0x20] sm:$0xff]
        %v301 = vld [vmem:[%s219 + $0x28] sm:$0xff]
        %v302 = vld [vmem:[%s219 + $0x30] sm:$0xff]
        %v303 = vld [vmem:[%s219 + $0x38] sm:$0xff]
        %v304 = vld [vmem:[%s219 + $0x40] sm:$0xff]
        %vm305 = vcmask 531456
        %v307 = vsel %vm305, %v278, 0
        %v310 = vsel %vm305, %v279, 0
        %v313 = vsel %vm305, %v280, 0
        %v316 = vsel %vm305, %v281, 0
        %v319 = vsel %vm305, %v282, 0
        %v322 = vsel %vm305, %v283, 0
        %v325 = vsel %vm305, %v284, 0
        %v328 = vsel %vm305, %v285, 0
        %v331 = vsel %vm305, %v286, 0
        %vm333 = vcmask 1040384
        %v335 = vsel %vm333, %v295, 0
        %337 = vmatpush.msra.mxu0 0.0
        %338 = vmatpush.msra.mxu0 0.0
        %339 = vmatpush.msra.mxu0 0.0
        %340 = vmatpush.msra.mxu0 0.0
        %341 = vmatpush.msra.mxu0 0.0
        %342 = vmatpush.msra.mxu0 0.0
        %343 = vmatpush.msra.mxu0 0.0
        %344 = vmatpush.msra.mxu0 %v335
        %345 = vmatpush.msra.mxu0 %v294
        %346 = vmatpush.msra.mxu0 %v293
        %347 = vmatpush.msra.mxu0 %v292
        %348 = vmatpush.msra.mxu0 %v291
        %349 = vmatpush.msra.mxu0 %v290
        %350 = vmatpush.msra.mxu0 %v289
        %351 = vmatpush.msra.mxu0 %v288
        %352 = vmatpush.msra.mxu0 %v287
        %353 = vmatmul.f32.gmra.mxu0 %v307
        %v354 = vpop.f32.mrf.mxu0
        %v355 = vadd.f32 %v296, %v354
        %356 = vmatmul.f32.gmra.mxu0 %v310
        %v357 = vpop.f32.mrf.mxu0
        %v358 = vadd.f32 %v297, %v357
        %359 = vmatmul.f32.gmra.mxu0 %v313
        %v360 = vpop.f32.mrf.mxu0
        %v361 = vadd.f32 %v298, %v360
        %362 = vmatmul.f32.gmra.mxu0 %v316
        %v363 = vpop.f32.mrf.mxu0
        %v364 = vadd.f32 %v299, %v363
        %365 = vmatmul.f32.gmra.mxu0 %v319
        %v366 = vpop.f32.mrf.mxu0
        %v367 = vadd.f32 %v300, %v366
        %368 = vmatmul.f32.gmra.mxu0 %v322
        %v369 = vpop.f32.mrf.mxu0
        %v370 = vadd.f32 %v301, %v369
        %371 = vmatmul.f32.gmra.mxu0 %v325
        %v372 = vpop.f32.mrf.mxu0
        %v373 = vadd.f32 %v302, %v372
        %374 = vmatmul.f32.gmra.mxu0 %v328
        %v375 = vpop.f32.mrf.mxu0
        %v376 = vadd.f32 %v303, %v375
        %377 = vmatmul.f32.gmra.mxu0 %v331
        %v378 = vpop.f32.mrf.mxu0
        %v379 = vadd.f32 %v304, %v378
        %380 = vdwg.mxu0
        %381 = vst [vmem:[%s204] sm:$0xff] %v355
        %382 = vst [vmem:[%s204 + $0x8] sm:$0xff] %v358
        %383 = vst [vmem:[%s204 + $0x10] sm:$0xff] %v361
        %384 = vst [vmem:[%s204 + $0x18] sm:$0xff] %v364
        %385 = vst [vmem:[%s204 + $0x20] sm:$0xff] %v367
        %386 = vst [vmem:[%s204 + $0x28] sm:$0xff] %v370
        %387 = vst [vmem:[%s204 + $0x30] sm:$0xff] %v373
        %388 = vst [vmem:[%s204 + $0x38] sm:$0xff] %v376
        %389 = vst [vmem:[%s204 + $0x40] sm:$0xff] %v379
        %s390 = sand.u32 %s114, 1
        %s391 = scalar_lea.sflag [#allocation3], %s390
        %s392 = sand.u32 %s114, 1
        %s393 = smul.addr %s392, 72
        %s394 = scalar_lea.vmem [#allocation2], %s393
        // Predicated region
        $region33: #{tpu_custom_call.1} parent=31 // pred_check
          %p395 = pneg %p124
        $region34: #{tpu_custom_call.1} parent=31 // pred_check_branch
          %397 = sbr.rel (%p395) target = $region36
        $region35: #{tpu_custom_call.1} parent=31 // pred_region
          %s398 = smul.u32 9, %s22
          %400 = vsyncadd %s391, 0
          %s401 = smul.addr %s21, 9
          %s402 = sadd.s32 %s398, %s401
          %s403 = smul.addr %s402, 8
          %s404 = scalar_lea.hbm %s3, %s403
          %s405 = sshll.u32 %s394, 4
          %s406 = int_to_ptr.vmem [resolvable:$true] %s405
          %s407 = sshll.u32 %s404, 4
          %s408 = int_to_ptr.hbm [resolvable:$true] %s407
          %413 = dma.vmem_to_hbm [thread:$0]  %s406, 1152, %s408, %s391, 128, 128, 8
        $region36: #{tpu_custom_call.1} parent=31 // pred_fallthru
          _
      $region32: #{tpu_custom_call.1} parent=5 // pred_fallthru
        _
      %p414 = scmp.le.s32.totalorder 2, %s12
      // Predicated region
      $region37: #{tpu_custom_call.1} parent=5 // pred_check
        %p415 = pneg %p414
      $region38: #{tpu_custom_call.1} parent=5 // pred_check_branch
        %417 = sbr.rel (%p415) target = $region40
      $region39: #{tpu_custom_call.1} parent=5 // pred_region
        %s418 = ssub.s32 %s12, 2
        // Predicated region
        $region41: #{tpu_custom_call.1} parent=39 // pred_check
          %p419 = pneg %p130
        $region42: #{tpu_custom_call.1} parent=39 // pred_check_branch
          %421 = sbr.rel (%p419) target = $region44
        $region43: #{tpu_custom_call.1} parent=39 // pred_region
          %s422 = sand.u32 %s115, 1
          %s423 = scalar_lea.sflag [#allocation3], %s422
          %s424 = sand.u32 %s115, 1
          %s425 = smul.addr %s424, 72
          %s426 = scalar_lea.vmem [#allocation2], %s425
          %428 = dma.done %s423, 1152
        $region44: #{tpu_custom_call.1} parent=39 // pred_fallthru
          _
      $region40: #{tpu_custom_call.1} parent=5 // pred_fallthru
        _
    $region6: #{tpu_custom_call.1} parent=1 // loop_footer
      %s16 = sadd.s32 1, %s12
    $region7: #{tpu_custom_call.1} parent=1 // loop_footer_branch
      %11 = sbr.rel target = $region3
    $region8: #{tpu_custom_call.1} parent=1 // loop_exit
      _
    %429 = vsyncpa [#allocation3], 1
    %s430 = scalar_lea.sflag [#allocation3], 1
    %431 = vsyncpa %s430, 1

</llo_original>
